<compile_context>
chip_gen: v5e
topology: v5e:2x2
jax: 0.10.0
libtpu: 0.0.40
codegen_flags: <defaults>
</compile_context>

<pallas_src>
import functools

import jax
import jax.numpy as jnp
from jax.experimental import pallas as pl
from jax.experimental.pallas import tpu as pltpu


_VMEM_LIMIT = 32 * 1024 * 1024  # portable across v5e/v6e/v7x; tiles sized well below it


# ----------------------------------------------------------------------------
# Pallas kernels
# ----------------------------------------------------------------------------
def _conv_bn_relu_kernel(patches_ref, w_ref, bias_ref, o_ref):
    # patches: (TM, K) bf16   w: (K, Cout) bf16 (BN scale pre-folded)
    # bias:    (1, Cout) f32  -> o: (TM, Cout) bf16
    acc = jnp.dot(patches_ref[...], w_ref[...], preferred_element_type=jnp.float32)
    o_ref[...] = jnp.maximum(acc + bias_ref[...], 0.0).astype(o_ref.dtype)


def _head_kernel(feats_ref, w_ref, b_ref, o_ref):
    # feats: (TN, HW, C) bf16   w: (C, num_classes) f32   b: (1, num_classes) f32
    pooled = jnp.mean(feats_ref[...].astype(jnp.float32), axis=1)   # AvgPool(1) + Flatten
    o_ref[...] = (jnp.dot(pooled, w_ref[...], preferred_element_type=jnp.float32)
                  + b_ref[...]).astype(o_ref.dtype)


# ----------------------------------------------------------------------------
# pallas_call wrappers (1-D grid over rows, parallel for megacore on v7x)
# ----------------------------------------------------------------------------
def conv_bn_relu_matmul(patches, w, bias, *, tm=1024):
    M, K = patches.shape
    Cout = w.shape[1]
    tm = M if M <= tm else tm        # tm is a multiple of 8 when it tiles M
    grid = (pl.cdiv(M, tm),)
    return pl.pallas_call(
        _conv_bn_relu_kernel,
        out_shape=jax.ShapeDtypeStruct((M, Cout), jnp.bfloat16),
        grid_spec=pltpu.PrefetchScalarGridSpec(
            num_scalar_prefetch=0,
            grid=grid,
            in_specs=[pl.BlockSpec((tm, K), lambda i: (i, 0)),
                      pl.BlockSpec((K, Cout), lambda i: (0, 0)),
                      pl.BlockSpec((1, Cout), lambda i: (0, 0))],
            out_specs=pl.BlockSpec((tm, Cout), lambda i: (i, 0)),
        ),
        compiler_params=pltpu.CompilerParams(
            dimension_semantics=("parallel",),
            vmem_limit_bytes=_VMEM_LIMIT),
    )(patches, w, bias)


def classifier_head(feats, w, b, *, tn=8):
    N, HW, C = feats.shape
    num_classes = w.shape[1]
    tn = N if N <= tn else tn
    grid = (pl.cdiv(N, tn),)
    return pl.pallas_call(
        _head_kernel,
        out_shape=jax.ShapeDtypeStruct((N, num_classes), jnp.float32),
        grid_spec=pltpu.PrefetchScalarGridSpec(
            num_scalar_prefetch=0,
            grid=grid,
            in_specs=[pl.BlockSpec((tn, HW, C), lambda i: (i, 0, 0)),
                      pl.BlockSpec((C, num_classes), lambda i: (0, 0)),
                      pl.BlockSpec((1, num_classes), lambda i: (0, 0))],
            out_specs=pl.BlockSpec((tn, num_classes), lambda i: (i, 0)),
        ),
        compiler_params=pltpu.CompilerParams(
            dimension_semantics=("parallel",),
            vmem_limit_bytes=_VMEM_LIMIT),
    )(feats, w, b)


# ----------------------------------------------------------------------------
# Glue: im2col and parameter folding
# ----------------------------------------------------------------------------
def im2col(x_nhwc, k=3, stride=2, pad=1):
    """x: (N, H, W, C) -> patches (N*Ho*Wo, k*k*C), ordered (kh, kw, Cin)."""
    xp = jnp.pad(x_nhwc, ((0, 0), (pad, pad), (pad, pad), (0, 0)))
    N, Hp, Wp, C = xp.shape
    Ho = (Hp - k) // stride + 1
    Wo = (Wp - k) // stride + 1
    cols = []
    for di in range(k):
        for dj in range(k):
            cols.append(xp[:, di:di + stride * Ho:stride, dj:dj + stride * Wo:stride, :])
    p = jnp.concatenate(cols, axis=-1)          # (N, Ho, Wo, k*k*C)
    return p.reshape(N * Ho * Wo, k * k * C), (N, Ho, Wo)


def fold_conv_bn(conv_w_oihw, conv_b, gamma, beta, running_mean, running_var, eps=1e-5):
    """Fold BN (eval, running stats) fully into the matmul:
    relu(patches @ w_folded + bias) == relu(BN(conv(x))).
    w_folded carries the per-channel BN scale; ordering matches im2col's
    (kh, kw, Cin) layout. Weights are returned in bf16 for the MXU."""
    cout, cin, kh, kw = conv_w_oihw.shape
    s = gamma / jnp.sqrt(running_var + eps)                       # per-channel scale
    w_mat = jnp.transpose(conv_w_oihw, (2, 3, 1, 0)).reshape(kh * kw * cin, cout)
    w_mat = (w_mat * s[None, :]).astype(jnp.bfloat16)
    b = ((conv_b - running_mean) * s + beta).astype(jnp.float32)
    return w_mat, b.reshape(1, cout)


# ----------------------------------------------------------------------------
# Model: deterministic parameter construction + forward
# ----------------------------------------------------------------------------
def init_params(key, num_classes):
    chans = [(3, 16), (16, 32), (32, 64), (64, 128)]
    params = {"blocks": []}
    for i, (cin, cout) in enumerate(chans):
        keys = jax.random.split(jax.random.fold_in(key, i), 6)
        blk = {
            "conv_w": jax.random.normal(keys[0], (cout, cin, 3, 3), jnp.float32) * 0.1,
            "conv_b": jax.random.normal(keys[1], (cout,), jnp.float32) * 0.1,
            "bn_gamma": 1.0 + 0.1 * jax.random.normal(keys[2], (cout,), jnp.float32),
            "bn_beta": 0.1 * jax.random.normal(keys[3], (cout,), jnp.float32),
            "bn_mean": 0.1 * jax.random.normal(keys[4], (cout,), jnp.float32),
            "bn_var": jnp.abs(jax.random.normal(keys[5], (cout,), jnp.float32)) + 0.5,
        }
        params["blocks"].append(blk)
    kw, kb = jax.random.split(jax.random.fold_in(key, 99))
    params["fc_w"] = jax.random.normal(kw, (num_classes, 128), jnp.float32) * 0.05
    params["fc_b"] = jax.random.normal(kb, (num_classes,), jnp.float32) * 0.05
    return params


@functools.partial(jax.jit, static_argnames=("num_classes",))
def simple_jetson_cnn_forward(x_nchw, params, num_classes):
    # NCHW (PyTorch convention) -> NHWC, bf16 activations for the TPU kernels.
    x = jnp.transpose(x_nchw, (0, 2, 3, 1)).astype(jnp.bfloat16)

    # Feature extractor: 4x [Conv2d(3x3, s=2, p=1) + BatchNorm2d(eval) + ReLU],
    # each fused into one M-tiled Pallas MXU matmul kernel.
    for blk in params["blocks"]:
        patches, (n, ho, wo) = im2col(x, k=3, stride=2, pad=1)
        w_mat, bias = fold_conv_bn(blk["conv_w"], blk["conv_b"],
                                   blk["bn_gamma"], blk["bn_beta"],
                                   blk["bn_mean"], blk["bn_var"])
        y = conv_bn_relu_matmul(patches, w_mat, bias)             # (N*Ho*Wo, Cout) bf16
        x = y.reshape(n, ho, wo, -1)

    # Classifier: AdaptiveAvgPool2d(1) + Flatten + Linear(128, num_classes)
    n, h, w, c = x.shape
    feats = x.reshape(n, h * w, c)
    fc_w = jnp.transpose(params["fc_w"], (1, 0)).astype(jnp.float32)   # (128, num_classes)
    fc_b = params["fc_b"].reshape(1, num_classes).astype(jnp.float32)
    logits = classifier_head(feats, fc_w, fc_b)                   # (N, num_classes) f32
    return logits


if __name__ == "__main__":
    num_classes = 10
    key = jax.random.PRNGKey(0)
    k_x, k_p = jax.random.split(key)

    # Small input consistent with the module: NCHW, 3 input channels.
    x = jax.random.normal(k_x, (2, 3, 16, 16), jnp.float32)
    params = init_params(k_p, num_classes)

    logits = simple_jetson_cnn_forward(x, params, num_classes)
    jax.block_until_ready(logits)
    assert logits.shape == (2, num_classes)
    assert logits.dtype == jnp.float32
    print("KERNEL_OK")
</pallas_src>

<mosaic_0001>
module attributes {stable_mosaic.version = 11 : i64} {
  func.func @_conv_bn_relu_kernel(%arg0: i32, %arg1: memref<128x27xbf16, #tpu.memory_space<vmem>>, %arg2: memref<27x16xbf16, #tpu.memory_space<vmem>>, %arg3: memref<1x16xf32, #tpu.memory_space<vmem>>, %arg4: memref<128x16xbf16, #tpu.memory_space<vmem>>) attributes {dimension_semantics = [#tpu.dimension_semantics<parallel>], iteration_bounds = array<i64: 1>, scalar_prefetch = 0 : i64, scratch_operands = 0 : i64, tpu.core_type = #tpu.core_type<tc>, window_params = [{transform_indices = @transform_0, window_bounds = array<i64: 128, 27>}, {pipeline_mode = #tpu.pipeline_mode<synchronous>, transform_indices = @transform_1, window_bounds = array<i64: 27, 16>}, {pipeline_mode = #tpu.pipeline_mode<synchronous>, transform_indices = @transform_2, window_bounds = array<i64: 1, 16>}, {transform_indices = @transform_3, window_bounds = array<i64: 128, 16>}]} {
    %c0 = arith.constant 0 : index
    %c0_0 = arith.constant 0 : index
    %0 = vector.load %arg1[%c0, %c0_0] : memref<128x27xbf16, #tpu.memory_space<vmem>>, vector<128x27xbf16>
    %c0_1 = arith.constant 0 : index
    %c0_2 = arith.constant 0 : index
    %1 = vector.load %arg2[%c0_1, %c0_2] : memref<27x16xbf16, #tpu.memory_space<vmem>>, vector<27x16xbf16>
    %cst = arith.constant dense<0.000000e+00> : vector<128x16xf32>
    %2 = tpu.matmul %0, %1, %cst {dimension_numbers = #tpu.dot_dimension_numbers<[1], [0], [0], [1], [0, 0, 1, 1], [], []>} : vector<128x27xbf16>, vector<27x16xbf16>, vector<128x16xf32> -> vector<128x16xf32>
    %c0_3 = arith.constant 0 : index
    %c0_4 = arith.constant 0 : index
    %3 = vector.load %arg3[%c0_3, %c0_4] : memref<1x16xf32, #tpu.memory_space<vmem>>, vector<1x16xf32>
    %4 = vector.broadcast %3 : vector<1x16xf32> to vector<128x16xf32>
    %5 = arith.addf %2, %4 : vector<128x16xf32>
    %cst_5 = arith.constant 0.000000e+00 : f32
    %6 = vector.broadcast %cst_5 : f32 to vector<128x16xf32>
    %7 = arith.maximumf %5, %6 : vector<128x16xf32>
    %8 = arith.truncf %7 : vector<128x16xf32> to vector<128x16xbf16>
    %c0_6 = arith.constant 0 : index
    %c0_7 = arith.constant 0 : index
    %9 = vector.load %arg4[%c0_6, %c0_7] : memref<128x16xbf16, #tpu.memory_space<vmem>>, vector<128x16xbf16>
    tpu.vector_store %arg4[%c0_6, %c0_7], %8 {strides = array<i32>} : memref<128x16xbf16, #tpu.memory_space<vmem>>, vector<128x16xbf16>,
    return
  }
  func.func @transform_0(%arg0: i32) -> (i32, i32) {
    %c0_i32 = arith.constant 0 : i32
    %c0_i32_0 = arith.constant 0 : i32
    return %arg0, %c0_i32 : i32, i32
  }
  func.func @transform_1(%arg0: i32) -> (i32, i32) {
    %c0_i32 = arith.constant 0 : i32
    %c0_i32_0 = arith.constant 0 : i32
    %c0_i32_1 = arith.constant 0 : i32
    return %c0_i32, %c0_i32_0 : i32, i32
  }
  func.func @transform_2(%arg0: i32) -> (i32, i32) {
    %c0_i32 = arith.constant 0 : i32
    %c0_i32_0 = arith.constant 0 : i32
    %c0_i32_1 = arith.constant 0 : i32
    return %c0_i32, %c0_i32_0 : i32, i32
  }
  func.func @transform_3(%arg0: i32) -> (i32, i32) {
    %c0_i32 = arith.constant 0 : i32
    %c0_i32_0 = arith.constant 0 : i32
    return %arg0, %c0_i32 : i32, i32
  }
}

module attributes {stable_mosaic.version = 11 : i64} {
  func.func @_conv_bn_relu_kernel(%arg0: i32, %arg1: memref<32x144xbf16, #tpu.memory_space<vmem>>, %arg2: memref<144x32xbf16, #tpu.memory_space<vmem>>, %arg3: memref<1x32xf32, #tpu.memory_space<vmem>>, %arg4: memref<32x32xbf16, #tpu.memory_space<vmem>>) attributes {dimension_semantics = [#tpu.dimension_semantics<parallel>], iteration_bounds = array<i64: 1>, scalar_prefetch = 0 : i64, scratch_operands = 0 : i64, tpu.core_type = #tpu.core_type<tc>, window_params = [{transform_indices = @transform_0, window_bounds = array<i64: 32, 144>}, {pipeline_mode = #tpu.pipeline_mode<synchronous>, transform_indices = @transform_1, window_bounds = array<i64: 144, 32>}, {pipeline_mode = #tpu.pipeline_mode<synchronous>, transform_indices = @transform_2, window_bounds = array<i64: 1, 32>}, {transform_indices = @transform_3, window_bounds = array<i64: 32, 32>}]} {
    %c0 = arith.constant 0 : index
    %c0_0 = arith.constant 0 : index
    %0 = vector.load %arg1[%c0, %c0_0] : memref<32x144xbf16, #tpu.memory_space<vmem>>, vector<32x144xbf16>
    %c0_1 = arith.constant 0 : index
    %c0_2 = arith.constant 0 : index
    %1 = vector.load %arg2[%c0_1, %c0_2] : memref<144x32xbf16, #tpu.memory_space<vmem>>, vector<144x32xbf16>
    %cst = arith.constant dense<0.000000e+00> : vector<32x32xf32>
    %2 = tpu.matmul %0, %1, %cst {dimension_numbers = #tpu.dot_dimension_numbers<[1], [0], [0], [1], [0, 0, 1, 1], [], []>} : vector<32x144xbf16>, vector<144x32xbf16>, vector<32x32xf32> -> vector<32x32xf32>
    %c0_3 = arith.constant 0 : index
    %c0_4 = arith.constant 0 : index
    %3 = vector.load %arg3[%c0_3, %c0_4] : memref<1x32xf32, #tpu.memory_space<vmem>>, vector<1x32xf32>
    %4 = vector.broadcast %3 : vector<1x32xf32> to vector<32x32xf32>
    %5 = arith.addf %2, %4 : vector<32x32xf32>
    %cst_5 = arith.constant 0.000000e+00 : f32
    %6 = vector.broadcast %cst_5 : f32 to vector<32x32xf32>
    %7 = arith.maximumf %5, %6 : vector<32x32xf32>
    %8 = arith.truncf %7 : vector<32x32xf32> to vector<32x32xbf16>
    %c0_6 = arith.constant 0 : index
    %c0_7 = arith.constant 0 : index
    %9 = vector.load %arg4[%c0_6, %c0_7] : memref<32x32xbf16, #tpu.memory_space<vmem>>, vector<32x32xbf16>
    tpu.vector_store %arg4[%c0_6, %c0_7], %8 {strides = array<i32>} : memref<32x32xbf16, #tpu.memory_space<vmem>>, vector<32x32xbf16>,
    return
  }
  func.func @transform_0(%arg0: i32) -> (i32, i32) {
    %c0_i32 = arith.constant 0 : i32
    %c0_i32_0 = arith.constant 0 : i32
    return %arg0, %c0_i32 : i32, i32
  }
  func.func @transform_1(%arg0: i32) -> (i32, i32) {
    %c0_i32 = arith.constant 0 : i32
    %c0_i32_0 = arith.constant 0 : i32
    %c0_i32_1 = arith.constant 0 : i32
    return %c0_i32, %c0_i32_0 : i32, i32
  }
  func.func @transform_2(%arg0: i32) -> (i32, i32) {
    %c0_i32 = arith.constant 0 : i32
    %c0_i32_0 = arith.constant 0 : i32
    %c0_i32_1 = arith.constant 0 : i32
    return %c0_i32, %c0_i32_0 : i32, i32
  }
  func.func @transform_3(%arg0: i32) -> (i32, i32) {
    %c0_i32 = arith.constant 0 : i32
    %c0_i32_0 = arith.constant 0 : i32
    return %arg0, %c0_i32 : i32, i32
  }
}

module attributes {stable_mosaic.version = 11 : i64} {
  func.func @_conv_bn_relu_kernel(%arg0: i32, %arg1: memref<2x576xbf16, #tpu.memory_space<vmem>>, %arg2: memref<576x128xbf16, #tpu.memory_space<vmem>>, %arg3: memref<1x128xf32, #tpu.memory_space<vmem>>, %arg4: memref<2x128xbf16, #tpu.memory_space<vmem>>) attributes {dimension_semantics = [#tpu.dimension_semantics<parallel>], iteration_bounds = array<i64: 1>, scalar_prefetch = 0 : i64, scratch_operands = 0 : i64, tpu.core_type = #tpu.core_type<tc>, window_params = [{transform_indices = @transform_0, window_bounds = array<i64: 2, 576>}, {pipeline_mode = #tpu.pipeline_mode<synchronous>, transform_indices = @transform_1, window_bounds = array<i64: 576, 128>}, {pipeline_mode = #tpu.pipeline_mode<synchronous>, transform_indices = @transform_2, window_bounds = array<i64: 1, 128>}, {transform_indices = @transform_3, window_bounds = array<i64: 2, 128>}]} {
    %c0 = arith.constant 0 : index
    %c0_0 = arith.constant 0 : index
    %0 = vector.load %arg1[%c0, %c0_0] : memref<2x576xbf16, #tpu.memory_space<vmem>>, vector<2x576xbf16>
    %c0_1 = arith.constant 0 : index
    %c0_2 = arith.constant 0 : index
    %1 = vector.load %arg2[%c0_1, %c0_2] : memref<576x128xbf16, #tpu.memory_space<vmem>>, vector<576x128xbf16>
    %cst = arith.constant dense<0.000000e+00> : vector<2x128xf32>
    %2 = tpu.matmul %0, %1, %cst {dimension_numbers = #tpu.dot_dimension_numbers<[1], [0], [0], [1], [0, 0, 1, 1], [], []>} : vector<2x576xbf16>, vector<576x128xbf16>, vector<2x128xf32> -> vector<2x128xf32>
    %c0_3 = arith.constant 0 : index
    %c0_4 = arith.constant 0 : index
    %3 = vector.load %arg3[%c0_3, %c0_4] : memref<1x128xf32, #tpu.memory_space<vmem>>, vector<1x128xf32>
    %4 = vector.broadcast %3 : vector<1x128xf32> to vector<2x128xf32>
    %5 = arith.addf %2, %4 : vector<2x128xf32>
    %cst_5 = arith.constant 0.000000e+00 : f32
    %6 = vector.broadcast %cst_5 : f32 to vector<2x128xf32>
    %7 = arith.maximumf %5, %6 : vector<2x128xf32>
    %8 = arith.truncf %7 : vector<2x128xf32> to vector<2x128xbf16>
    %c0_6 = arith.constant 0 : index
    %c0_7 = arith.constant 0 : index
    %9 = vector.load %arg4[%c0_6, %c0_7] : memref<2x128xbf16, #tpu.memory_space<vmem>>, vector<2x128xbf16>
    tpu.vector_store %arg4[%c0_6, %c0_7], %8 {strides = array<i32>} : memref<2x128xbf16, #tpu.memory_space<vmem>>, vector<2x128xbf16>,
    return
  }
  func.func @transform_0(%arg0: i32) -> (i32, i32) {
    %c0_i32 = arith.constant 0 : i32
    %c0_i32_0 = arith.constant 0 : i32
    return %arg0, %c0_i32 : i32, i32
  }
  func.func @transform_1(%arg0: i32) -> (i32, i32) {
    %c0_i32 = arith.constant 0 : i32
    %c0_i32_0 = arith.constant 0 : i32
    %c0_i32_1 = arith.constant 0 : i32
    return %c0_i32, %c0_i32_0 : i32, i32
  }
  func.func @transform_2(%arg0: i32) -> (i32, i32) {
    %c0_i32 = arith.constant 0 : i32
    %c0_i32_0 = arith.constant 0 : i32
    %c0_i32_1 = arith.constant 0 : i32
    return %c0_i32, %c0_i32_0 : i32, i32
  }
  func.func @transform_3(%arg0: i32) -> (i32, i32) {
    %c0_i32 = arith.constant 0 : i32
    %c0_i32_0 = arith.constant 0 : i32
    return %arg0, %c0_i32 : i32, i32
  }
}

module attributes {stable_mosaic.version = 11 : i64} {
  func.func @_conv_bn_relu_kernel(%arg0: i32, %arg1: memref<8x288xbf16, #tpu.memory_space<vmem>>, %arg2: memref<288x64xbf16, #tpu.memory_space<vmem>>, %arg3: memref<1x64xf32, #tpu.memory_space<vmem>>, %arg4: memref<8x64xbf16, #tpu.memory_space<vmem>>) attributes {dimension_semantics = [#tpu.dimension_semantics<parallel>], iteration_bounds = array<i64: 1>, scalar_prefetch = 0 : i64, scratch_operands = 0 : i64, tpu.core_type = #tpu.core_type<tc>, window_params = [{transform_indices = @transform_0, window_bounds = array<i64: 8, 288>}, {pipeline_mode = #tpu.pipeline_mode<synchronous>, transform_indices = @transform_1, window_bounds = array<i64: 288, 64>}, {pipeline_mode = #tpu.pipeline_mode<synchronous>, transform_indices = @transform_2, window_bounds = array<i64: 1, 64>}, {transform_indices = @transform_3, window_bounds = array<i64: 8, 64>}]} {
    %c0 = arith.constant 0 : index
    %c0_0 = arith.constant 0 : index
    %0 = vector.load %arg1[%c0, %c0_0] : memref<8x288xbf16, #tpu.memory_space<vmem>>, vector<8x288xbf16>
    %c0_1 = arith.constant 0 : index
    %c0_2 = arith.constant 0 : index
    %1 = vector.load %arg2[%c0_1, %c0_2] : memref<288x64xbf16, #tpu.memory_space<vmem>>, vector<288x64xbf16>
    %cst = arith.constant dense<0.000000e+00> : vector<8x64xf32>
    %2 = tpu.matmul %0, %1, %cst {dimension_numbers = #tpu.dot_dimension_numbers<[1], [0], [0], [1], [0, 0, 1, 1], [], []>} : vector<8x288xbf16>, vector<288x64xbf16>, vector<8x64xf32> -> vector<8x64xf32>
    %c0_3 = arith.constant 0 : index
    %c0_4 = arith.constant 0 : index
    %3 = vector.load %arg3[%c0_3, %c0_4] : memref<1x64xf32, #tpu.memory_space<vmem>>, vector<1x64xf32>
    %4 = vector.broadcast %3 : vector<1x64xf32> to vector<8x64xf32>
    %5 = arith.addf %2, %4 : vector<8x64xf32>
    %cst_5 = arith.constant 0.000000e+00 : f32
    %6 = vector.broadcast %cst_5 : f32 to vector<8x64xf32>
    %7 = arith.maximumf %5, %6 : vector<8x64xf32>
    %8 = arith.truncf %7 : vector<8x64xf32> to vector<8x64xbf16>
    %c0_6 = arith.constant 0 : index
    %c0_7 = arith.constant 0 : index
    %9 = vector.load %arg4[%c0_6, %c0_7] : memref<8x64xbf16, #tpu.memory_space<vmem>>, vector<8x64xbf16>
    tpu.vector_store %arg4[%c0_6, %c0_7], %8 {strides = array<i32>} : memref<8x64xbf16, #tpu.memory_space<vmem>>, vector<8x64xbf16>,
    return
  }
  func.func @transform_0(%arg0: i32) -> (i32, i32) {
    %c0_i32 = arith.constant 0 : i32
    %c0_i32_0 = arith.constant 0 : i32
    return %arg0, %c0_i32 : i32, i32
  }
  func.func @transform_1(%arg0: i32) -> (i32, i32) {
    %c0_i32 = arith.constant 0 : i32
    %c0_i32_0 = arith.constant 0 : i32
    %c0_i32_1 = arith.constant 0 : i32
    return %c0_i32, %c0_i32_0 : i32, i32
  }
  func.func @transform_2(%arg0: i32) -> (i32, i32) {
    %c0_i32 = arith.constant 0 : i32
    %c0_i32_0 = arith.constant 0 : i32
    %c0_i32_1 = arith.constant 0 : i32
    return %c0_i32, %c0_i32_0 : i32, i32
  }
  func.func @transform_3(%arg0: i32) -> (i32, i32) {
    %c0_i32 = arith.constant 0 : i32
    %c0_i32_0 = arith.constant 0 : i32
    return %arg0, %c0_i32 : i32, i32
  }
}

module attributes {stable_mosaic.version = 11 : i64} {
  func.func @_head_kernel(%arg0: i32, %arg1: memref<2x1x128xbf16, #tpu.memory_space<vmem>>, %arg2: memref<128x10xf32, #tpu.memory_space<vmem>>, %arg3: memref<1x10xf32, #tpu.memory_space<vmem>>, %arg4: memref<2x10xf32, #tpu.memory_space<vmem>>) attributes {dimension_semantics = [#tpu.dimension_semantics<parallel>], iteration_bounds = array<i64: 1>, scalar_prefetch = 0 : i64, scratch_operands = 0 : i64, tpu.core_type = #tpu.core_type<tc>, window_params = [{transform_indices = @transform_0, window_bounds = array<i64: 2, 1, 128>}, {pipeline_mode = #tpu.pipeline_mode<synchronous>, transform_indices = @transform_1, window_bounds = array<i64: 128, 10>}, {pipeline_mode = #tpu.pipeline_mode<synchronous>, transform_indices = @transform_2, window_bounds = array<i64: 1, 10>}, {transform_indices = @transform_3, window_bounds = array<i64: 2, 10>}]} {
    %c0 = arith.constant 0 : index
    %c0_0 = arith.constant 0 : index
    %c0_1 = arith.constant 0 : index
    %0 = vector.load %arg1[%c0, %c0_0, %c0_1] : memref<2x1x128xbf16, #tpu.memory_space<vmem>>, vector<2x1x128xbf16>
    %1 = arith.extf %0 : vector<2x1x128xbf16> to vector<2x1x128xf32>
    %cst = arith.constant dense<0.000000e+00> : vector<2x128xf32>
    %2 = vector.multi_reduction <add>, %1, %cst [1] : vector<2x1x128xf32> to vector<2x128xf32>
    %cst_2 = arith.constant 1.000000e+00 : f32
    %3 = vector.broadcast %cst_2 : f32 to vector<2x128xf32>
    %4 = arith.divf %2, %3 : vector<2x128xf32>
    %c0_3 = arith.constant 0 : index
    %c0_4 = arith.constant 0 : index
    %5 = vector.load %arg2[%c0_3, %c0_4] : memref<128x10xf32, #tpu.memory_space<vmem>>, vector<128x10xf32>
    %cst_5 = arith.constant dense<0.000000e+00> : vector<2x10xf32>
    %6 = tpu.matmul %4, %5, %cst_5 {dimension_numbers = #tpu.dot_dimension_numbers<[1], [0], [0], [1], [0, 0, 1, 1], [], []>} : vector<2x128xf32>, vector<128x10xf32>, vector<2x10xf32> -> vector<2x10xf32>
    %c0_6 = arith.constant 0 : index
    %c0_7 = arith.constant 0 : index
    %7 = vector.load %arg3[%c0_6, %c0_7] : memref<1x10xf32, #tpu.memory_space<vmem>>, vector<1x10xf32>
    %8 = vector.broadcast %7 : vector<1x10xf32> to vector<2x10xf32>
    %9 = arith.addf %6, %8 : vector<2x10xf32>
    %c0_8 = arith.constant 0 : index
    %c0_9 = arith.constant 0 : index
    %10 = vector.load %arg4[%c0_8, %c0_9] : memref<2x10xf32, #tpu.memory_space<vmem>>, vector<2x10xf32>
    tpu.vector_store %arg4[%c0_8, %c0_9], %9 {strides = array<i32>} : memref<2x10xf32, #tpu.memory_space<vmem>>, vector<2x10xf32>,
    return
  }
  func.func @transform_0(%arg0: i32) -> (i32, i32, i32) {
    %c0_i32 = arith.constant 0 : i32
    %c0_i32_0 = arith.constant 0 : i32
    %c0_i32_1 = arith.constant 0 : i32
    return %arg0, %c0_i32, %c0_i32_0 : i32, i32, i32
  }
  func.func @transform_1(%arg0: i32) -> (i32, i32) {
    %c0_i32 = arith.constant 0 : i32
    %c0_i32_0 = arith.constant 0 : i32
    %c0_i32_1 = arith.constant 0 : i32
    return %c0_i32, %c0_i32_0 : i32, i32
  }
  func.func @transform_2(%arg0: i32) -> (i32, i32) {
    %c0_i32 = arith.constant 0 : i32
    %c0_i32_0 = arith.constant 0 : i32
    %c0_i32_1 = arith.constant 0 : i32
    return %c0_i32, %c0_i32_0 : i32, i32
  }
  func.func @transform_3(%arg0: i32) -> (i32, i32) {
    %c0_i32 = arith.constant 0 : i32
    %c0_i32_0 = arith.constant 0 : i32
    return %arg0, %c0_i32 : i32, i32
  }
}

</mosaic_0001>

<llo_original>
// kernel: simple_jetson_cnn_forward.6
$region0: #{simple_jetson_cnn_forward.6}
  #allocation0 [shape = 'u32[]', space=smem, size = 0x4, offset = 0x4, fixed_abs, tag = 'smem constant byte address 0x4 - core index']
  #allocation1 [shape = 'u32[72,128]{1,0:T(1,128)}', space=vmem, size = 0x9000, scoped, tag = 'internal scratch']
  %s0 = inlined_call_operand.vmem [shape: bf16[32,144], index: 0, kind: input, shape index: {}]
  %s1 = inlined_call_operand.vmem [shape: bf16[144,32], index: 1, kind: input, shape index: {}]
  %s2 = inlined_call_operand.vmem [shape: f32[1,32], index: 2, kind: input, shape index: {}]
  %s3 = inlined_call_operand.vmem [shape: bf16[32,32], index: 3, kind: output, shape index: {}]
  %s4 = sld [smem:[#allocation0]]
  $region22: #{simple_jetson_cnn_forward.6} parent=0
    _
  %s6 = ssub.s32 1, %s4
  %s7 = scalar_select 0, %s6, %s4
  // Predicated region
  $region2: #{simple_jetson_cnn_forward.6} parent=0 // pred_check
    _
  $region3: #{simple_jetson_cnn_forward.6} parent=0 // pred_check_branch
    %9 = sbr.rel (0) target = $region5
  $region4: #{simple_jetson_cnn_forward.6} parent=0 // pred_region
    _
  $region5: #{simple_jetson_cnn_forward.6} parent=0 // pred_fallthru
    _
  // Predicated region
  $region6: #{simple_jetson_cnn_forward.6} parent=0 // pred_check
    _
  $region7: #{simple_jetson_cnn_forward.6} parent=0 // pred_check_branch
    %11 = sbr.rel (0) target = $region9
  $region8: #{simple_jetson_cnn_forward.6} parent=0 // pred_region
    _
  $region9: #{simple_jetson_cnn_forward.6} parent=0 // pred_fallthru
    _
  // Predicated region
  $region10: #{simple_jetson_cnn_forward.6} parent=0 // pred_check
    _
  $region11: #{simple_jetson_cnn_forward.6} parent=0 // pred_check_branch
    %13 = sbr.rel (0) target = $region13
  $region12: #{simple_jetson_cnn_forward.6} parent=0 // pred_region
    _
  $region13: #{simple_jetson_cnn_forward.6} parent=0 // pred_fallthru
    _
  %v15 = vld [vmem:[%s0] sm:$0xff]
  %v16 = vld [vmem:[%s0 + $0x8] sm:$0xff]
  %v17 = vld [vmem:[%s0 + $0x10] sm:$0xff]
  %v18 = vld [vmem:[%s0 + $0x18] sm:$0xff]
  %v19 = vld [vmem:[%s1] sm:$0xf]
  %v20 = vld [vmem:[%s1 + $0x4] sm:$0xf]
  %v21 = vld [vmem:[%s1 + $0x8] sm:$0xf]
  %v22 = vld [vmem:[%s1 + $0xc] sm:$0xf]
  %v23 = vld [vmem:[%s1 + $0x10] sm:$0xf]
  %v24 = vld [vmem:[%s1 + $0x14] sm:$0xf]
  %v25 = vld [vmem:[%s1 + $0x18] sm:$0xf]
  %v26 = vld [vmem:[%s1 + $0x1c] sm:$0xf]
  %v27 = vld [vmem:[%s1 + $0x20] sm:$0xf]
  %v28 = vld [vmem:[%s1 + $0x24] sm:$0xf]
  %v29 = vld [vmem:[%s1 + $0x28] sm:$0xf]
  %v30 = vld [vmem:[%s1 + $0x2c] sm:$0xf]
  %v31 = vld [vmem:[%s1 + $0x30] sm:$0xf]
  %v32 = vld [vmem:[%s1 + $0x34] sm:$0xf]
  %v33 = vld [vmem:[%s1 + $0x38] sm:$0xf]
  %v34 = vld [vmem:[%s1 + $0x3c] sm:$0xf]
  %v35 = vld [vmem:[%s1 + $0x40] sm:$0xf]
  %v36 = vld [vmem:[%s1 + $0x44] sm:$0xf]
  %v37 = vld [vmem:[%s2] sm:$0x1]
  %v39 = vperm.slane %v37, 0
  %v45 = vunpack.c.l.b16 %v15
  %v46 = vunpack.c.h.b16 %v15
  %v47 = vunpack.c.l.b16 %v16
  %v48 = vunpack.c.h.b16 %v16
  %v49 = vunpack.c.l.b16 %v17
  %v50 = vunpack.c.h.b16 %v17
  %v51 = vunpack.c.l.b16 %v18
  %v52 = vunpack.c.h.b16 %v18
  %v53 = vpack.c.b16 %v47, %v45
  %v54 = vpack.c.b16 %v48, %v46
  %v55 = vpack.c.b16 %v51, %v49
  %v56 = vpack.c.b16 %v52, %v50
  %v77 = vunpack.c.l.b16 %v19
  %v78 = vunpack.c.l.b16 %v20
  %v79 = vunpack.c.l.b16 %v21
  %v80 = vunpack.c.l.b16 %v22
  %v81 = vunpack.c.l.b16 %v23
  %v82 = vunpack.c.l.b16 %v24
  %v83 = vunpack.c.l.b16 %v25
  %v84 = vunpack.c.l.b16 %v26
  %v85 = vunpack.c.l.b16 %v27
  %v86 = vunpack.c.l.b16 %v28
  %v87 = vunpack.c.l.b16 %v29
  %v88 = vunpack.c.l.b16 %v30
  %v89 = vunpack.c.l.b16 %v31
  %v90 = vunpack.c.l.b16 %v32
  %v91 = vunpack.c.l.b16 %v33
  %v92 = vunpack.c.l.b16 %v34
  %v93 = vunpack.c.l.b16 %v35
  %v94 = vunpack.c.l.b16 %v36
  %v95 = vpack.c.b16 %v78, %v77
  %v96 = vpack.c.b16 %v80, %v79
  %v97 = vpack.c.b16 %v82, %v81
  %v98 = vpack.c.b16 %v84, %v83
  %v99 = vpack.c.b16 %v86, %v85
  %v100 = vpack.c.b16 %v88, %v87
  %v101 = vpack.c.b16 %v90, %v89
  %v102 = vpack.c.b16 %v92, %v91
  %v103 = vpack.c.b16 %v94, %v93
  %vm113 = vcmask 130048
  %v115 = vsel %vm113, %v54, 0
  %v118 = vsel %vm113, %v56, 0
  %120 = vmatpush.bf16.msra.mxu0 %v102
  %121 = vmatpush.bf16.msra.mxu0 %v101
  %122 = vmatpush.bf16.msra.mxu0 %v100
  %123 = vmatpush.bf16.msra.mxu0 %v99
  %124 = vmatpush.bf16.msra.mxu0 %v98
  %125 = vmatpush.bf16.msra.mxu0 %v97
  %126 = vmatpush.bf16.msra.mxu0 %v96
  %127 = vmatpush.bf16.msra.mxu0 %v95
  %128 = vmatmul.bf16.gmra.mxu0 %v53
  %v129 = vpop.f32.mrf.mxu0
  %v130 = vadd.f32 %v39, %v129
  %v131 = vpop.f32.mrf.mxu0
  %v132 = vadd.f32 %v39, %v131
  %133 = vmatmul.bf16.gmra.mxu0 %v55
  %v134 = vpop.f32.mrf.mxu0
  %v135 = vadd.f32 %v39, %v134
  %v136 = vpop.f32.mrf.mxu0
  %v137 = vadd.f32 %v39, %v136
  %138 = vdwg.mxu0
  %139 = vmatpush.bf16.msra.mxu0 0
  %140 = vmatpush.bf16.msra.mxu0 0
  %141 = vmatpush.bf16.msra.mxu0 0
  %142 = vmatpush.bf16.msra.mxu0 0
  %143 = vmatpush.bf16.msra.mxu0 0
  %144 = vmatpush.bf16.msra.mxu0 0
  %145 = vmatpush.bf16.msra.mxu0 0
  %146 = vmatpush.bf16.msra.mxu0 %v103
  %147 = vmatmul.bf16.gmra.mxu0 %v115
  %v148 = vpop.f32.mrf.mxu0
  %v149 = vadd.f32 %v130, %v148
  %v150 = vpop.f32.mrf.mxu0
  %v151 = vadd.f32 %v132, %v150
  %152 = vmatmul.bf16.gmra.mxu0 %v118
  %v153 = vpop.f32.mrf.mxu0
  %v154 = vadd.f32 %v135, %v153
  %v155 = vpop.f32.mrf.mxu0
  %v156 = vadd.f32 %v137, %v155
  %157 = vdwg.mxu0
  %v158 = vmax.f32 %v149, 0.0
  %v159 = vmax.f32 %v151, 0.0
  %v160 = vmax.f32 %v154, 0.0
  %v161 = vmax.f32 %v156, 0.0
  %v162 = vpack.c.bf16 %v158, %v158
  %v163 = vpack.c.bf16 %v159, %v159
  %v164 = vpack.c.bf16 %v160, %v160
  %v165 = vpack.c.bf16 %v161, %v161
  %vm166 = vcmask 257024
  %167 = vst.msk [vmem:[%s3] sm:$0xf] %vm166, %v162
  %168 = vst.msk [vmem:[%s3 + $0x4] sm:$0xf] %vm166, %v163
  %169 = vst.msk [vmem:[%s3 + $0x8] sm:$0xf] %vm166, %v164
  %170 = vst.msk [vmem:[%s3 + $0xc] sm:$0xf] %vm166, %v165
  // Predicated region
  $region14: #{simple_jetson_cnn_forward.6} parent=0 // pred_check
    _
  $region15: #{simple_jetson_cnn_forward.6} parent=0 // pred_check_branch
    %172 = sbr.rel (0) target = $region17
  $region16: #{simple_jetson_cnn_forward.6} parent=0 // pred_region
    _
  $region17: #{simple_jetson_cnn_forward.6} parent=0 // pred_fallthru
    _
  // Predicated region
  $region18: #{simple_jetson_cnn_forward.6} parent=0 // pred_check
    _
  $region19: #{simple_jetson_cnn_forward.6} parent=0 // pred_check_branch
    %174 = sbr.rel (0) target = $region21
  $region20: #{simple_jetson_cnn_forward.6} parent=0 // pred_region
    _
  $region21: #{simple_jetson_cnn_forward.6} parent=0 // pred_fallthru
    _

// kernel: simple_jetson_cnn_forward.5
$region0: #{simple_jetson_cnn_forward.5}
  #allocation0 [shape = 'u32[]', space=smem, size = 0x4, offset = 0x4, fixed_abs, tag = 'smem constant byte address 0x4 - core index']
  #allocation1 [shape = 'u32[72,128]{1,0:T(1,128)}', space=vmem, size = 0x9000, scoped, tag = 'internal scratch']
  %s0 = inlined_call_operand.vmem [shape: bf16[128,27], index: 0, kind: input, shape index: {}]
  %s1 = inlined_call_operand.vmem [shape: bf16[27,16], index: 1, kind: input, shape index: {}]
  %s2 = inlined_call_operand.vmem [shape: f32[1,16], index: 2, kind: input, shape index: {}]
  %s3 = inlined_call_operand.vmem [shape: bf16[128,16], index: 3, kind: output, shape index: {}]
  %s4 = sld [smem:[#allocation0]]
  $region22: #{simple_jetson_cnn_forward.5} parent=0
    _
  %s6 = ssub.s32 1, %s4
  %s7 = scalar_select 0, %s6, %s4
  // Predicated region
  $region2: #{simple_jetson_cnn_forward.5} parent=0 // pred_check
    _
  $region3: #{simple_jetson_cnn_forward.5} parent=0 // pred_check_branch
    %9 = sbr.rel (0) target = $region5
  $region4: #{simple_jetson_cnn_forward.5} parent=0 // pred_region
    _
  $region5: #{simple_jetson_cnn_forward.5} parent=0 // pred_fallthru
    _
  // Predicated region
  $region6: #{simple_jetson_cnn_forward.5} parent=0 // pred_check
    _
  $region7: #{simple_jetson_cnn_forward.5} parent=0 // pred_check_branch
    %11 = sbr.rel (0) target = $region9
  $region8: #{simple_jetson_cnn_forward.5} parent=0 // pred_region
    _
  $region9: #{simple_jetson_cnn_forward.5} parent=0 // pred_fallthru
    _
  // Predicated region
  $region10: #{simple_jetson_cnn_forward.5} parent=0 // pred_check
    _
  $region11: #{simple_jetson_cnn_forward.5} parent=0 // pred_check_branch
    %13 = sbr.rel (0) target = $region13
  $region12: #{simple_jetson_cnn_forward.5} parent=0 // pred_region
    _
  $region13: #{simple_jetson_cnn_forward.5} parent=0 // pred_fallthru
    _
  %v15 = vld [vmem:[%s0] sm:$0xf]
  %v16 = vld [vmem:[%s0 + $0x4] sm:$0xf]
  %v17 = vld [vmem:[%s0 + $0x8] sm:$0xf]
  %v18 = vld [vmem:[%s0 + $0xc] sm:$0xf]
  %v19 = vld [vmem:[%s0 + $0x10] sm:$0xf]
  %v20 = vld [vmem:[%s0 + $0x14] sm:$0xf]
  %v21 = vld [vmem:[%s0 + $0x18] sm:$0xf]
  %v22 = vld [vmem:[%s0 + $0x1c] sm:$0xf]
  %v23 = vld [vmem:[%s0 + $0x20] sm:$0xf]
  %v24 = vld [vmem:[%s0 + $0x24] sm:$0xf]
  %v25 = vld [vmem:[%s0 + $0x28] sm:$0xf]
  %v26 = vld [vmem:[%s0 + $0x2c] sm:$0xf]
  %v27 = vld [vmem:[%s0 + $0x30] sm:$0xf]
  %v28 = vld [vmem:[%s0 + $0x34] sm:$0xf]
  %v29 = vld [vmem:[%s0 + $0x38] sm:$0xf]
  %v30 = vld [vmem:[%s0 + $0x3c] sm:$0xf]
  %v31 = vld [vmem:[%s1] sm:$0xf]
  %v32 = vld [vmem:[%s1 + $0x4] sm:$0xf]
  %v33 = vld [vmem:[%s1 + $0x8] sm:$0xf]
  %v34 = vld [vmem:[%s1 + $0xc] sm:$0x3]
  %v35 = vld [vmem:[%s2] sm:$0x1]
  %v37 = vperm.slane %v35, 0
  %v55 = vunpack.c.l.b16 %v15
  %v56 = vunpack.c.l.b16 %v16
  %v57 = vunpack.c.l.b16 %v17
  %v58 = vunpack.c.l.b16 %v18
  %v59 = vunpack.c.l.b16 %v19
  %v60 = vunpack.c.l.b16 %v20
  %v61 = vunpack.c.l.b16 %v21
  %v62 = vunpack.c.l.b16 %v22
  %v63 = vunpack.c.l.b16 %v23
  %v64 = vunpack.c.l.b16 %v24
  %v65 = vunpack.c.l.b16 %v25
  %v66 = vunpack.c.l.b16 %v26
  %v67 = vunpack.c.l.b16 %v27
  %v68 = vunpack.c.l.b16 %v28
  %v69 = vunpack.c.l.b16 %v29
  %v70 = vunpack.c.l.b16 %v30
  %v71 = vpack.c.b16 %v56, %v55
  %v72 = vpack.c.b16 %v58, %v57
  %v73 = vpack.c.b16 %v60, %v59
  %v74 = vpack.c.b16 %v62, %v61
  %v75 = vpack.c.b16 %v64, %v63
  %v76 = vpack.c.b16 %v66, %v65
  %v77 = vpack.c.b16 %v68, %v67
  %v78 = vpack.c.b16 %v70, %v69
  %v83 = vunpack.c.l.b16 %v31
  %v84 = vunpack.c.l.b16 %v32
  %v85 = vunpack.c.l.b16 %v33
  %v86 = vunpack.c.l.b16 %v34
  %v87 = vpack.c.b16 %v84, %v83
  %v88 = vpack.c.b16 %v86, %v85
  %vm90 = vcmask 220160
  %v92 = vsel %vm90, %v71, 0
  %v95 = vsel %vm90, %v72, 0
  %v98 = vsel %vm90, %v73, 0
  %v101 = vsel %vm90, %v74, 0
  %v104 = vsel %vm90, %v75, 0
  %v107 = vsel %vm90, %v76, 0
  %v110 = vsel %vm90, %v77, 0
  %v113 = vsel %vm90, %v78, 0
  %vm115 = vcmask 1044480
  %vm116 = vcmask 1045504
  %v117 = vsel %vm115, 4294967295, 65535
  %v118 = vsel %vm116, %v117, 0
  %v120 = vand.u32 %v88, %v118
  %122 = vmatpush.bf16.msra.mxu0 0
  %123 = vmatpush.bf16.msra.mxu0 0
  %124 = vmatpush.bf16.msra.mxu0 0
  %125 = vmatpush.bf16.msra.mxu0 0
  %126 = vmatpush.bf16.msra.mxu0 0
  %127 = vmatpush.bf16.msra.mxu0 0
  %128 = vmatpush.bf16.msra.mxu0 %v120
  %129 = vmatpush.bf16.msra.mxu0 %v87
  %130 = vmatmul.bf16.gmra.mxu0 %v92
  %v131 = vpop.f32.mrf.mxu0
  %v132 = vadd.f32 %v37, %v131
  %v133 = vpop.f32.mrf.mxu0
  %v134 = vadd.f32 %v37, %v133
  %135 = vmatmul.bf16.gmra.mxu0 %v95
  %v136 = vpop.f32.mrf.mxu0
  %v137 = vadd.f32 %v37, %v136
  %v138 = vpop.f32.mrf.mxu0
  %v139 = vadd.f32 %v37, %v138
  %140 = vmatmul.bf16.gmra.mxu0 %v98
  %v141 = vpop.f32.mrf.mxu0
  %v142 = vadd.f32 %v37, %v141
  %v143 = vpop.f32.mrf.mxu0
  %v144 = vadd.f32 %v37, %v143
  %145 = vmatmul.bf16.gmra.mxu0 %v101
  %v146 = vpop.f32.mrf.mxu0
  %v147 = vadd.f32 %v37, %v146
  %v148 = vpop.f32.mrf.mxu0
  %v149 = vadd.f32 %v37, %v148
  %150 = vmatmul.bf16.gmra.mxu0 %v104
  %v151 = vpop.f32.mrf.mxu0
  %v152 = vadd.f32 %v37, %v151
  %v153 = vpop.f32.mrf.mxu0
  %v154 = vadd.f32 %v37, %v153
  %155 = vmatmul.bf16.gmra.mxu0 %v107
  %v156 = vpop.f32.mrf.mxu0
  %v157 = vadd.f32 %v37, %v156
  %v158 = vpop.f32.mrf.mxu0
  %v159 = vadd.f32 %v37, %v158
  %160 = vmatmul.bf16.gmra.mxu0 %v110
  %v161 = vpop.f32.mrf.mxu0
  %v162 = vadd.f32 %v37, %v161
  %v163 = vpop.f32.mrf.mxu0
  %v164 = vadd.f32 %v37, %v163
  %165 = vmatmul.bf16.gmra.mxu0 %v113
  %v166 = vpop.f32.mrf.mxu0
  %v167 = vadd.f32 %v37, %v166
  %v168 = vpop.f32.mrf.mxu0
  %v169 = vadd.f32 %v37, %v168
  %170 = vdwg.mxu0
  %v171 = vmax.f32 %v132, 0.0
  %v172 = vmax.f32 %v134, 0.0
  %v173 = vmax.f32 %v137, 0.0
  %v174 = vmax.f32 %v139, 0.0
  %v175 = vmax.f32 %v142, 0.0
  %v176 = vmax.f32 %v144, 0.0
  %v177 = vmax.f32 %v147, 0.0
  %v178 = vmax.f32 %v149, 0.0
  %v179 = vmax.f32 %v152, 0.0
  %v180 = vmax.f32 %v154, 0.0
  %v181 = vmax.f32 %v157, 0.0
  %v182 = vmax.f32 %v159, 0.0
  %v183 = vmax.f32 %v162, 0.0
  %v184 = vmax.f32 %v164, 0.0
  %v185 = vmax.f32 %v167, 0.0
  %v186 = vmax.f32 %v169, 0.0
  %v187 = vpack.c.bf16 %v171, %v171
  %v188 = vpack.c.bf16 %v172, %v172
  %v189 = vpack.c.bf16 %v173, %v173
  %v190 = vpack.c.bf16 %v174, %v174
  %v191 = vpack.c.bf16 %v175, %v175
  %v192 = vpack.c.bf16 %v176, %v176
  %v193 = vpack.c.bf16 %v177, %v177
  %v194 = vpack.c.bf16 %v178, %v178
  %v195 = vpack.c.bf16 %v179, %v179
  %v196 = vpack.c.bf16 %v180, %v180
  %v197 = vpack.c.bf16 %v181, %v181
  %v198 = vpack.c.bf16 %v182, %v182
  %v199 = vpack.c.bf16 %v183, %v183
  %v200 = vpack.c.bf16 %v184, %v184
  %v201 = vpack.c.bf16 %v185, %v185
  %v202 = vpack.c.bf16 %v186, %v186
  %vm203 = vcmask 125952
  %204 = vst.msk [vmem:[%s3] sm:$0xf] %vm203, %v187
  %205 = vst.msk [vmem:[%s3 + $0x4] sm:$0xf] %vm203, %v188
  %206 = vst.msk [vmem:[%s3 + $0x8] sm:$0xf] %vm203, %v189
  %207 = vst.msk [vmem:[%s3 + $0xc] sm:$0xf] %vm203, %v190
  %208 = vst.msk [vmem:[%s3 + $0x10] sm:$0xf] %vm203, %v191
  %209 = vst.msk [vmem:[%s3 + $0x14] sm:$0xf] %vm203, %v192
  %210 = vst.msk [vmem:[%s3 + $0x18] sm:$0xf] %vm203, %v193
  %211 = vst.msk [vmem:[%s3 + $0x1c] sm:$0xf] %vm203, %v194
  %212 = vst.msk [vmem:[%s3 + $0x20] sm:$0xf] %vm203, %v195
  %213 = vst.msk [vmem:[%s3 + $0x24] sm:$0xf] %vm203, %v196
  %214 = vst.msk [vmem:[%s3 + $0x28] sm:$0xf] %vm203, %v197
  %215 = vst.msk [vmem:[%s3 + $0x2c] sm:$0xf] %vm203, %v198
  %216 = vst.msk [vmem:[%s3 + $0x30] sm:$0xf] %vm203, %v199
  %217 = vst.msk [vmem:[%s3 + $0x34] sm:$0xf] %vm203, %v200
  %218 = vst.msk [vmem:[%s3 + $0x38] sm:$0xf] %vm203, %v201
  %219 = vst.msk [vmem:[%s3 + $0x3c] sm:$0xf] %vm203, %v202
  // Predicated region
  $region14: #{simple_jetson_cnn_forward.5} parent=0 // pred_check
    _
  $region15: #{simple_jetson_cnn_forward.5} parent=0 // pred_check_branch
    %221 = sbr.rel (0) target = $region17
  $region16: #{simple_jetson_cnn_forward.5} parent=0 // pred_region
    _
  $region17: #{simple_jetson_cnn_forward.5} parent=0 // pred_fallthru
    _
  // Predicated region
  $region18: #{simple_jetson_cnn_forward.5} parent=0 // pred_check
    _
  $region19: #{simple_jetson_cnn_forward.5} parent=0 // pred_check_branch
    %223 = sbr.rel (0) target = $region21
  $region20: #{simple_jetson_cnn_forward.5} parent=0 // pred_region
    _
  $region21: #{simple_jetson_cnn_forward.5} parent=0 // pred_fallthru
    _

// kernel: simple_jetson_cnn_forward.7
$region0: #{simple_jetson_cnn_forward.7}
  #allocation0 [shape = 'u32[]', space=smem, size = 0x4, offset = 0x4, fixed_abs, tag = 'smem constant byte address 0x4 - core index']
  #allocation1 [shape = 'u32[72,128]{1,0:T(1,128)}', space=vmem, size = 0x9000, scoped, tag = 'internal scratch']
  %s0 = inlined_call_operand.vmem [shape: bf16[8,288], index: 0, kind: input, shape index: {}]
  %s1 = inlined_call_operand.vmem [shape: bf16[288,64], index: 1, kind: input, shape index: {}]
  %s2 = inlined_call_operand.vmem [shape: f32[1,64], index: 2, kind: input, shape index: {}]
  %s3 = inlined_call_operand.vmem [shape: bf16[8,64], index: 3, kind: output, shape index: {}]
  %s4 = sld [smem:[#allocation0]]
  $region22: #{simple_jetson_cnn_forward.7} parent=0
    _
  %s6 = ssub.s32 1, %s4
  %s7 = scalar_select 0, %s6, %s4
  // Predicated region
  $region2: #{simple_jetson_cnn_forward.7} parent=0 // pred_check
    _
  $region3: #{simple_jetson_cnn_forward.7} parent=0 // pred_check_branch
    %9 = sbr.rel (0) target = $region5
  $region4: #{simple_jetson_cnn_forward.7} parent=0 // pred_region
    _
  $region5: #{simple_jetson_cnn_forward.7} parent=0 // pred_fallthru
    _
  // Predicated region
  $region6: #{simple_jetson_cnn_forward.7} parent=0 // pred_check
    _
  $region7: #{simple_jetson_cnn_forward.7} parent=0 // pred_check_branch
    %11 = sbr.rel (0) target = $region9
  $region8: #{simple_jetson_cnn_forward.7} parent=0 // pred_region
    _
  $region9: #{simple_jetson_cnn_forward.7} parent=0 // pred_fallthru
    _
  // Predicated region
  $region10: #{simple_jetson_cnn_forward.7} parent=0 // pred_check
    _
  $region11: #{simple_jetson_cnn_forward.7} parent=0 // pred_check_branch
    %13 = sbr.rel (0) target = $region13
  $region12: #{simple_jetson_cnn_forward.7} parent=0 // pred_region
    _
  $region13: #{simple_jetson_cnn_forward.7} parent=0 // pred_fallthru
    _
  %v15 = vld [vmem:[%s0] sm:$0xff]
  %v16 = vld [vmem:[%s0 + $0x8] sm:$0xf]
  %v17 = vld [vmem:[%s1] sm:$0xf]
  %v18 = vld [vmem:[%s1 + $0x4] sm:$0xf]
  %v19 = vld [vmem:[%s1 + $0x8] sm:$0xf]
  %v20 = vld [vmem:[%s1 + $0xc] sm:$0xf]
  %v21 = vld [vmem:[%s1 + $0x10] sm:$0xf]
  %v22 = vld [vmem:[%s1 + $0x14] sm:$0xf]
  %v23 = vld [vmem:[%s1 + $0x18] sm:$0xf]
  %v24 = vld [vmem:[%s1 + $0x1c] sm:$0xf]
  %v25 = vld [vmem:[%s1 + $0x20] sm:$0xf]
  %v26 = vld [vmem:[%s1 + $0x24] sm:$0xf]
  %v27 = vld [vmem:[%s1 + $0x28] sm:$0xf]
  %v28 = vld [vmem:[%s1 + $0x2c] sm:$0xf]
  %v29 = vld [vmem:[%s1 + $0x30] sm:$0xf]
  %v30 = vld [vmem:[%s1 + $0x34] sm:$0xf]
  %v31 = vld [vmem:[%s1 + $0x38] sm:$0xf]
  %v32 = vld [vmem:[%s1 + $0x3c] sm:$0xf]
  %v33 = vld [vmem:[%s1 + $0x40] sm:$0xf]
  %v34 = vld [vmem:[%s1 + $0x44] sm:$0xf]
  %v35 = vld [vmem:[%s1 + $0x48] sm:$0xf]
  %v36 = vld [vmem:[%s1 + $0x4c] sm:$0xf]
  %v37 = vld [vmem:[%s1 + $0x50] sm:$0xf]
  %v38 = vld [vmem:[%s1 + $0x54] sm:$0xf]
  %v39 = vld [vmem:[%s1 + $0x58] sm:$0xf]
  %v40 = vld [vmem:[%s1 + $0x5c] sm:$0xf]
  %v41 = vld [vmem:[%s1 + $0x60] sm:$0xf]
  %v42 = vld [vmem:[%s1 + $0x64] sm:$0xf]
  %v43 = vld [vmem:[%s1 + $0x68] sm:$0xf]
  %v44 = vld [vmem:[%s1 + $0x6c] sm:$0xf]
  %v45 = vld [vmem:[%s1 + $0x70] sm:$0xf]
  %v46 = vld [vmem:[%s1 + $0x74] sm:$0xf]
  %v47 = vld [vmem:[%s1 + $0x78] sm:$0xf]
  %v48 = vld [vmem:[%s1 + $0x7c] sm:$0xf]
  %v49 = vld [vmem:[%s1 + $0x80] sm:$0xf]
  %v50 = vld [vmem:[%s1 + $0x84] sm:$0xf]
  %v51 = vld [vmem:[%s1 + $0x88] sm:$0xf]
  %v52 = vld [vmem:[%s1 + $0x8c] sm:$0xf]
  %v53 = vld [vmem:[%s2] sm:$0x1]
  %v55 = vperm.slane %v53, 0
  %v59 = vunpack.c.l.b16 %v15
  %v60 = vunpack.c.h.b16 %v15
  %v61 = vunpack.c.l.b16 %v16
  %v62 = vpack.c.b16 %v59, %v59
  %v63 = vpack.c.b16 %v60, %v60
  %v64 = vpack.c.b16 %v61, %v61
  %v103 = vunpack.c.l.b16 %v17
  %v104 = vunpack.c.l.b16 %v18
  %v105 = vunpack.c.l.b16 %v19
  %v106 = vunpack.c.l.b16 %v20
  %v107 = vunpack.c.l.b16 %v21
  %v108 = vunpack.c.l.b16 %v22
  %v109 = vunpack.c.l.b16 %v23
  %v110 = vunpack.c.l.b16 %v24
  %v111 = vunpack.c.l.b16 %v25
  %v112 = vunpack.c.l.b16 %v26
  %v113 = vunpack.c.l.b16 %v27
  %v114 = vunpack.c.l.b16 %v28
  %v115 = vunpack.c.l.b16 %v29
  %v116 = vunpack.c.l.b16 %v30
  %v117 = vunpack.c.l.b16 %v31
  %v118 = vunpack.c.l.b16 %v32
  %v119 = vunpack.c.l.b16 %v33
  %v120 = vunpack.c.l.b16 %v34
  %v121 = vunpack.c.l.b16 %v35
  %v122 = vunpack.c.l.b16 %v36
  %v123 = vunpack.c.l.b16 %v37
  %v124 = vunpack.c.l.b16 %v38
  %v125 = vunpack.c.l.b16 %v39
  %v126 = vunpack.c.l.b16 %v40
  %v127 = vunpack.c.l.b16 %v41
  %v128 = vunpack.c.l.b16 %v42
  %v129 = vunpack.c.l.b16 %v43
  %v130 = vunpack.c.l.b16 %v44
  %v131 = vunpack.c.l.b16 %v45
  %v132 = vunpack.c.l.b16 %v46
  %v133 = vunpack.c.l.b16 %v47
  %v134 = vunpack.c.l.b16 %v48
  %v135 = vunpack.c.l.b16 %v49
  %v136 = vunpack.c.l.b16 %v50
  %v137 = vunpack.c.l.b16 %v51
  %v138 = vunpack.c.l.b16 %v52
  %v139 = vpack.c.b16 %v104, %v103
  %v140 = vpack.c.b16 %v106, %v105
  %v141 = vpack.c.b16 %v108, %v107
  %v142 = vpack.c.b16 %v110, %v109
  %v143 = vpack.c.b16 %v112, %v111
  %v144 = vpack.c.b16 %v114, %v113
  %v145 = vpack.c.b16 %v116, %v115
  %v146 = vpack.c.b16 %v118, %v117
  %v147 = vpack.c.b16 %v120, %v119
  %v148 = vpack.c.b16 %v122, %v121
  %v149 = vpack.c.b16 %v124, %v123
  %v150 = vpack.c.b16 %v126, %v125
  %v151 = vpack.c.b16 %v128, %v127
  %v152 = vpack.c.b16 %v130, %v129
  %v153 = vpack.c.b16 %v132, %v131
  %v154 = vpack.c.b16 %v134, %v133
  %v155 = vpack.c.b16 %v136, %v135
  %v156 = vpack.c.b16 %v138, %v137
  %vm175 = vcmask 261120
  %v177 = vsel %vm175, %v64, 0
  %179 = vmatpush.bf16.msra.mxu0 %v146
  %180 = vmatpush.bf16.msra.mxu0 %v145
  %181 = vmatpush.bf16.msra.mxu0 %v144
  %182 = vmatpush.bf16.msra.mxu0 %v143
  %183 = vmatpush.bf16.msra.mxu0 %v142
  %184 = vmatpush.bf16.msra.mxu0 %v141
  %185 = vmatpush.bf16.msra.mxu0 %v140
  %186 = vmatpush.bf16.msra.mxu0 %v139
  %187 = vmatmul.bf16.gmra.mxu0 %v62
  %v188 = vpop.f32.mrf.mxu0
  %v189 = vadd.f32 %v55, %v188
  %v190 = vpop.f32.mrf.mxu0
  %191 = vdwg.mxu0
  %192 = vmatpush.bf16.msra.mxu0 %v154
  %193 = vmatpush.bf16.msra.mxu0 %v153
  %194 = vmatpush.bf16.msra.mxu0 %v152
  %195 = vmatpush.bf16.msra.mxu0 %v151
  %196 = vmatpush.bf16.msra.mxu0 %v150
  %197 = vmatpush.bf16.msra.mxu0 %v149
  %198 = vmatpush.bf16.msra.mxu0 %v148
  %199 = vmatpush.bf16.msra.mxu0 %v147
  %200 = vmatmul.bf16.gmra.mxu0 %v63
  %v201 = vpop.f32.mrf.mxu0
  %v202 = vadd.f32 %v189, %v201
  %v203 = vpop.f32.mrf.mxu0
  %204 = vdwg.mxu0
  %205 = vmatpush.bf16.msra.mxu0 0
  %206 = vmatpush.bf16.msra.mxu0 0
  %207 = vmatpush.bf16.msra.mxu0 0
  %208 = vmatpush.bf16.msra.mxu0 0
  %209 = vmatpush.bf16.msra.mxu0 0
  %210 = vmatpush.bf16.msra.mxu0 0
  %211 = vmatpush.bf16.msra.mxu0 %v156
  %212 = vmatpush.bf16.msra.mxu0 %v155
  %213 = vmatmul.bf16.gmra.mxu0 %v177
  %v214 = vpop.f32.mrf.mxu0
  %v215 = vadd.f32 %v202, %v214
  %v216 = vpop.f32.mrf.mxu0
  %217 = vdwg.mxu0
  %v218 = vmax.f32 %v215, 0.0
  %v219 = vpack.c.bf16 %v218, %v218
  %vm220 = vcmask 519168
  %221 = vst.msk [vmem:[%s3] sm:$0xf] %vm220, %v219
  // Predicated region
  $region14: #{simple_jetson_cnn_forward.7} parent=0 // pred_check
    _
  $region15: #{simple_jetson_cnn_forward.7} parent=0 // pred_check_branch
    %223 = sbr.rel (0) target = $region17
  $region16: #{simple_jetson_cnn_forward.7} parent=0 // pred_region
    _
  $region17: #{simple_jetson_cnn_forward.7} parent=0 // pred_fallthru
    _
  // Predicated region
  $region18: #{simple_jetson_cnn_forward.7} parent=0 // pred_check
    _
  $region19: #{simple_jetson_cnn_forward.7} parent=0 // pred_check_branch
    %225 = sbr.rel (0) target = $region21
  $region20: #{simple_jetson_cnn_forward.7} parent=0 // pred_region
    _
  $region21: #{simple_jetson_cnn_forward.7} parent=0 // pred_fallthru
    _

// kernel: simple_jetson_cnn_forward.8
$region0: #{simple_jetson_cnn_forward.8}
  #allocation0 [shape = 'u32[]', space=smem, size = 0x4, offset = 0x4, fixed_abs, tag = 'smem constant byte address 0x4 - core index']
  #allocation1 [shape = 'u32[72,128]{1,0:T(1,128)}', space=vmem, size = 0x9000, scoped, tag = 'internal scratch']
  %s0 = inlined_call_operand.vmem [shape: bf16[2,576], index: 0, kind: input, shape index: {}]
  %s1 = inlined_call_operand.vmem [shape: bf16[576,128], index: 1, kind: input, shape index: {}]
  %s2 = inlined_call_operand.vmem [shape: f32[1,128], index: 2, kind: input, shape index: {}]
  %s3 = inlined_call_operand.vmem [shape: bf16[2,128], index: 3, kind: output, shape index: {}]
  %s4 = sld [smem:[#allocation0]]
  $region22: #{simple_jetson_cnn_forward.8} parent=0
    _
  %s6 = ssub.s32 1, %s4
  %s7 = scalar_select 0, %s6, %s4
  // Predicated region
  $region2: #{simple_jetson_cnn_forward.8} parent=0 // pred_check
    _
  $region3: #{simple_jetson_cnn_forward.8} parent=0 // pred_check_branch
    %9 = sbr.rel (0) target = $region5
  $region4: #{simple_jetson_cnn_forward.8} parent=0 // pred_region
    _
  $region5: #{simple_jetson_cnn_forward.8} parent=0 // pred_fallthru
    _
  // Predicated region
  $region6: #{simple_jetson_cnn_forward.8} parent=0 // pred_check
    _
  $region7: #{simple_jetson_cnn_forward.8} parent=0 // pred_check_branch
    %11 = sbr.rel (0) target = $region9
  $region8: #{simple_jetson_cnn_forward.8} parent=0 // pred_region
    _
  $region9: #{simple_jetson_cnn_forward.8} parent=0 // pred_fallthru
    _
  // Predicated region
  $region10: #{simple_jetson_cnn_forward.8} parent=0 // pred_check
    _
  $region11: #{simple_jetson_cnn_forward.8} parent=0 // pred_check_branch
    %13 = sbr.rel (0) target = $region13
  $region12: #{simple_jetson_cnn_forward.8} parent=0 // pred_region
    _
  $region13: #{simple_jetson_cnn_forward.8} parent=0 // pred_fallthru
    _
  %v15 = vld [vmem:[%s0] sm:$0x1f]
  %v16 = vld [vmem:[%s1] sm:$0xf]
  %v17 = vld [vmem:[%s1 + $0x4] sm:$0xf]
  %v18 = vld [vmem:[%s1 + $0x8] sm:$0xf]
  %v19 = vld [vmem:[%s1 + $0xc] sm:$0xf]
  %v20 = vld [vmem:[%s1 + $0x10] sm:$0xf]
  %v21 = vld [vmem:[%s1 + $0x14] sm:$0xf]
  %v22 = vld [vmem:[%s1 + $0x18] sm:$0xf]
  %v23 = vld [vmem:[%s1 + $0x1c] sm:$0xf]
  %v24 = vld [vmem:[%s1 + $0x20] sm:$0xf]
  %v25 = vld [vmem:[%s1 + $0x24] sm:$0xf]
  %v26 = vld [vmem:[%s1 + $0x28] sm:$0xf]
  %v27 = vld [vmem:[%s1 + $0x2c] sm:$0xf]
  %v28 = vld [vmem:[%s1 + $0x30] sm:$0xf]
  %v29 = vld [vmem:[%s1 + $0x34] sm:$0xf]
  %v30 = vld [vmem:[%s1 + $0x38] sm:$0xf]
  %v31 = vld [vmem:[%s1 + $0x3c] sm:$0xf]
  %v32 = vld [vmem:[%s1 + $0x40] sm:$0xf]
  %v33 = vld [vmem:[%s1 + $0x44] sm:$0xf]
  %v34 = vld [vmem:[%s1 + $0x48] sm:$0xf]
  %v35 = vld [vmem:[%s1 + $0x4c] sm:$0xf]
  %v36 = vld [vmem:[%s1 + $0x50] sm:$0xf]
  %v37 = vld [vmem:[%s1 + $0x54] sm:$0xf]
  %v38 = vld [vmem:[%s1 + $0x58] sm:$0xf]
  %v39 = vld [vmem:[%s1 + $0x5c] sm:$0xf]
  %v40 = vld [vmem:[%s1 + $0x60] sm:$0xf]
  %v41 = vld [vmem:[%s1 + $0x64] sm:$0xf]
  %v42 = vld [vmem:[%s1 + $0x68] sm:$0xf]
  %v43 = vld [vmem:[%s1 + $0x6c] sm:$0xf]
  %v44 = vld [vmem:[%s1 + $0x70] sm:$0xf]
  %v45 = vld [vmem:[%s1 + $0x74] sm:$0xf]
  %v46 = vld [vmem:[%s1 + $0x78] sm:$0xf]
  %v47 = vld [vmem:[%s1 + $0x7c] sm:$0xf]
  %v48 = vld [vmem:[%s1 + $0x80] sm:$0xf]
  %v49 = vld [vmem:[%s1 + $0x84] sm:$0xf]
  %v50 = vld [vmem:[%s1 + $0x88] sm:$0xf]
  %v51 = vld [vmem:[%s1 + $0x8c] sm:$0xf]
  %v52 = vld [vmem:[%s1 + $0x90] sm:$0xf]
  %v53 = vld [vmem:[%s1 + $0x94] sm:$0xf]
  %v54 = vld [vmem:[%s1 + $0x98] sm:$0xf]
  %v55 = vld [vmem:[%s1 + $0x9c] sm:$0xf]
  %v56 = vld [vmem:[%s1 + $0xa0] sm:$0xf]
  %v57 = vld [vmem:[%s1 + $0xa4] sm:$0xf]
  %v58 = vld [vmem:[%s1 + $0xa8] sm:$0xf]
  %v59 = vld [vmem:[%s1 + $0xac] sm:$0xf]
  %v60 = vld [vmem:[%s1 + $0xb0] sm:$0xf]
  %v61 = vld [vmem:[%s1 + $0xb4] sm:$0xf]
  %v62 = vld [vmem:[%s1 + $0xb8] sm:$0xf]
  %v63 = vld [vmem:[%s1 + $0xbc] sm:$0xf]
  %v64 = vld [vmem:[%s1 + $0xc0] sm:$0xf]
  %v65 = vld [vmem:[%s1 + $0xc4] sm:$0xf]
  %v66 = vld [vmem:[%s1 + $0xc8] sm:$0xf]
  %v67 = vld [vmem:[%s1 + $0xcc] sm:$0xf]
  %v68 = vld [vmem:[%s1 + $0xd0] sm:$0xf]
  %v69 = vld [vmem:[%s1 + $0xd4] sm:$0xf]
  %v70 = vld [vmem:[%s1 + $0xd8] sm:$0xf]
  %v71 = vld [vmem:[%s1 + $0xdc] sm:$0xf]
  %v72 = vld [vmem:[%s1 + $0xe0] sm:$0xf]
  %v73 = vld [vmem:[%s1 + $0xe4] sm:$0xf]
  %v74 = vld [vmem:[%s1 + $0xe8] sm:$0xf]
  %v75 = vld [vmem:[%s1 + $0xec] sm:$0xf]
  %v76 = vld [vmem:[%s1 + $0xf0] sm:$0xf]
  %v77 = vld [vmem:[%s1 + $0xf4] sm:$0xf]
  %v78 = vld [vmem:[%s1 + $0xf8] sm:$0xf]
  %v79 = vld [vmem:[%s1 + $0xfc] sm:$0xf]
  %v80 = vld [vmem:[%s1 + $0x100] sm:$0xf]
  %v81 = vld [vmem:[%s1 + $0x104] sm:$0xf]
  %v82 = vld [vmem:[%s1 + $0x108] sm:$0xf]
  %v83 = vld [vmem:[%s1 + $0x10c] sm:$0xf]
  %v84 = vld [vmem:[%s1 + $0x110] sm:$0xf]
  %v85 = vld [vmem:[%s1 + $0x114] sm:$0xf]
  %v86 = vld [vmem:[%s1 + $0x118] sm:$0xf]
  %v87 = vld [vmem:[%s1 + $0x11c] sm:$0xf]
  %v88 = vld [vmem:[%s2] sm:$0x1]
  %v90 = vperm.slane %v88, 0
  %93 = vst [vmem:[#allocation1] ss:$9 sm:$0xff] %v15
  %v94 = vld [vmem:[#allocation1] sm:$0xff]
  %v95 = vld [vmem:[#allocation1 + $0x9] sm:$0xff]
  %v96 = vld [vmem:[#allocation1 + $0x12] sm:$0xff]
  %v97 = vld [vmem:[#allocation1 + $0x1b] sm:$0xff]
  %v98 = vld [vmem:[#allocation1 + $0x24] sm:$0xff]
  %v175 = vunpack.c.l.b16 %v16
  %v176 = vunpack.c.l.b16 %v17
  %v177 = vunpack.c.l.b16 %v18
  %v178 = vunpack.c.l.b16 %v19
  %v179 = vunpack.c.l.b16 %v20
  %v180 = vunpack.c.l.b16 %v21
  %v181 = vunpack.c.l.b16 %v22
  %v182 = vunpack.c.l.b16 %v23
  %v183 = vunpack.c.l.b16 %v24
  %v184 = vunpack.c.l.b16 %v25
  %v185 = vunpack.c.l.b16 %v26
  %v186 = vunpack.c.l.b16 %v27
  %v187 = vunpack.c.l.b16 %v28
  %v188 = vunpack.c.l.b16 %v29
  %v189 = vunpack.c.l.b16 %v30
  %v190 = vunpack.c.l.b16 %v31
  %v191 = vunpack.c.l.b16 %v32
  %v192 = vunpack.c.l.b16 %v33
  %v193 = vunpack.c.l.b16 %v34
  %v194 = vunpack.c.l.b16 %v35
  %v195 = vunpack.c.l.b16 %v36
  %v196 = vunpack.c.l.b16 %v37
  %v197 = vunpack.c.l.b16 %v38
  %v198 = vunpack.c.l.b16 %v39
  %v199 = vunpack.c.l.b16 %v40
  %v200 = vunpack.c.l.b16 %v41
  %v201 = vunpack.c.l.b16 %v42
  %v202 = vunpack.c.l.b16 %v43
  %v203 = vunpack.c.l.b16 %v44
  %v204 = vunpack.c.l.b16 %v45
  %v205 = vunpack.c.l.b16 %v46
  %v206 = vunpack.c.l.b16 %v47
  %v207 = vunpack.c.l.b16 %v48
  %v208 = vunpack.c.l.b16 %v49
  %v209 = vunpack.c.l.b16 %v50
  %v210 = vunpack.c.l.b16 %v51
  %v211 = vunpack.c.l.b16 %v52
  %v212 = vunpack.c.l.b16 %v53
  %v213 = vunpack.c.l.b16 %v54
  %v214 = vunpack.c.l.b16 %v55
  %v215 = vunpack.c.l.b16 %v56
  %v216 = vunpack.c.l.b16 %v57
  %v217 = vunpack.c.l.b16 %v58
  %v218 = vunpack.c.l.b16 %v59
  %v219 = vunpack.c.l.b16 %v60
  %v220 = vunpack.c.l.b16 %v61
  %v221 = vunpack.c.l.b16 %v62
  %v222 = vunpack.c.l.b16 %v63
  %v223 = vunpack.c.l.b16 %v64
  %v224 = vunpack.c.l.b16 %v65
  %v225 = vunpack.c.l.b16 %v66
  %v226 = vunpack.c.l.b16 %v67
  %v227 = vunpack.c.l.b16 %v68
  %v228 = vunpack.c.l.b16 %v69
  %v229 = vunpack.c.l.b16 %v70
  %v230 = vunpack.c.l.b16 %v71
  %v231 = vunpack.c.l.b16 %v72
  %v232 = vunpack.c.l.b16 %v73
  %v233 = vunpack.c.l.b16 %v74
  %v234 = vunpack.c.l.b16 %v75
  %v235 = vunpack.c.l.b16 %v76
  %v236 = vunpack.c.l.b16 %v77
  %v237 = vunpack.c.l.b16 %v78
  %v238 = vunpack.c.l.b16 %v79
  %v239 = vunpack.c.l.b16 %v80
  %v240 = vunpack.c.l.b16 %v81
  %v241 = vunpack.c.l.b16 %v82
  %v242 = vunpack.c.l.b16 %v83
  %v243 = vunpack.c.l.b16 %v84
  %v244 = vunpack.c.l.b16 %v85
  %v245 = vunpack.c.l.b16 %v86
  %v246 = vunpack.c.l.b16 %v87
  %v247 = vpack.c.b16 %v176, %v175
  %v248 = vpack.c.b16 %v178, %v177
  %v249 = vpack.c.b16 %v180, %v179
  %v250 = vpack.c.b16 %v182, %v181
  %v251 = vpack.c.b16 %v184, %v183
  %v252 = vpack.c.b16 %v186, %v185
  %v253 = vpack.c.b16 %v188, %v187
  %v254 = vpack.c.b16 %v190, %v189
  %v255 = vpack.c.b16 %v192, %v191
  %v256 = vpack.c.b16 %v194, %v193
  %v257 = vpack.c.b16 %v196, %v195
  %v258 = vpack.c.b16 %v198, %v197
  %v259 = vpack.c.b16 %v200, %v199
  %v260 = vpack.c.b16 %v202, %v201
  %v261 = vpack.c.b16 %v204, %v203
  %v262 = vpack.c.b16 %v206, %v205
  %v263 = vpack.c.b16 %v208, %v207
  %v264 = vpack.c.b16 %v210, %v209
  %v265 = vpack.c.b16 %v212, %v211
  %v266 = vpack.c.b16 %v214, %v213
  %v267 = vpack.c.b16 %v216, %v215
  %v268 = vpack.c.b16 %v218, %v217
  %v269 = vpack.c.b16 %v220, %v219
  %v270 = vpack.c.b16 %v222, %v221
  %v271 = vpack.c.b16 %v224, %v223
  %v272 = vpack.c.b16 %v226, %v225
  %v273 = vpack.c.b16 %v228, %v227
  %v274 = vpack.c.b16 %v230, %v229
  %v275 = vpack.c.b16 %v232, %v231
  %v276 = vpack.c.b16 %v234, %v233
  %v277 = vpack.c.b16 %v236, %v235
  %v278 = vpack.c.b16 %v238, %v237
  %v279 = vpack.c.b16 %v240, %v239
  %v280 = vpack.c.b16 %v242, %v241
  %v281 = vpack.c.b16 %v244, %v243
  %v282 = vpack.c.b16 %v246, %v245
  %vm319 = vcmask 523264
  %v320 = vsel %vm319, %v98, 0
  %322 = vmatpush.bf16.msra.mxu0 %v254
  %323 = vmatpush.bf16.msra.mxu0 %v253
  %324 = vmatpush.bf16.msra.mxu0 %v252
  %325 = vmatpush.bf16.msra.mxu0 %v251
  %326 = vmatpush.bf16.msra.mxu0 %v250
  %327 = vmatpush.bf16.msra.mxu0 %v249
  %328 = vmatpush.bf16.msra.mxu0 %v248
  %329 = vmatpush.bf16.msra.mxu0 %v247
  %330 = vmatmul.bf16.gmra.mxu0 %v94
  %v331 = vpop.f32.mrf.mxu0
  %v332 = vadd.f32 %v90, %v331
  %v333 = vpop.f32.mrf.mxu0
  %334 = vdwg.mxu0
  %335 = vmatpush.bf16.msra.mxu0 %v262
  %336 = vmatpush.bf16.msra.mxu0 %v261
  %337 = vmatpush.bf16.msra.mxu0 %v260
  %338 = vmatpush.bf16.msra.mxu0 %v259
  %339 = vmatpush.bf16.msra.mxu0 %v258
  %340 = vmatpush.bf16.msra.mxu0 %v257
  %341 = vmatpush.bf16.msra.mxu0 %v256
  %342 = vmatpush.bf16.msra.mxu0 %v255
  %343 = vmatmul.bf16.gmra.mxu0 %v95
  %v344 = vpop.f32.mrf.mxu0
  %v345 = vadd.f32 %v332, %v344
  %v346 = vpop.f32.mrf.mxu0
  %347 = vdwg.mxu0
  %348 = vmatpush.bf16.msra.mxu0 %v270
  %349 = vmatpush.bf16.msra.mxu0 %v269
  %350 = vmatpush.bf16.msra.mxu0 %v268
  %351 = vmatpush.bf16.msra.mxu0 %v267
  %352 = vmatpush.bf16.msra.mxu0 %v266
  %353 = vmatpush.bf16.msra.mxu0 %v265
  %354 = vmatpush.bf16.msra.mxu0 %v264
  %355 = vmatpush.bf16.msra.mxu0 %v263
  %356 = vmatmul.bf16.gmra.mxu0 %v96
  %v357 = vpop.f32.mrf.mxu0
  %v358 = vadd.f32 %v345, %v357
  %v359 = vpop.f32.mrf.mxu0
  %360 = vdwg.mxu0
  %361 = vmatpush.bf16.msra.mxu0 %v278
  %362 = vmatpush.bf16.msra.mxu0 %v277
  %363 = vmatpush.bf16.msra.mxu0 %v276
  %364 = vmatpush.bf16.msra.mxu0 %v275
  %365 = vmatpush.bf16.msra.mxu0 %v274
  %366 = vmatpush.bf16.msra.mxu0 %v273
  %367 = vmatpush.bf16.msra.mxu0 %v272
  %368 = vmatpush.bf16.msra.mxu0 %v271
  %369 = vmatmul.bf16.gmra.mxu0 %v97
  %v370 = vpop.f32.mrf.mxu0
  %v371 = vadd.f32 %v358, %v370
  %v372 = vpop.f32.mrf.mxu0
  %373 = vdwg.mxu0
  %374 = vmatpush.bf16.msra.mxu0 0
  %375 = vmatpush.bf16.msra.mxu0 0
  %376 = vmatpush.bf16.msra.mxu0 0
  %377 = vmatpush.bf16.msra.mxu0 0
  %378 = vmatpush.bf16.msra.mxu0 %v282
  %379 = vmatpush.bf16.msra.mxu0 %v281
  %380 = vmatpush.bf16.msra.mxu0 %v280
  %381 = vmatpush.bf16.msra.mxu0 %v279
  %382 = vmatmul.bf16.gmra.mxu0 %v320
  %v383 = vpop.f32.mrf.mxu0
  %v384 = vadd.f32 %v371, %v383
  %v385 = vpop.f32.mrf.mxu0
  %386 = vdwg.mxu0
  %v387 = vmax.f32 %v384, 0.0
  %v388 = vpack.c.bf16 %v387, %v387
  %389 = vst [vmem:[%s3] sm:$0x1] %v388
  // Predicated region
  $region14: #{simple_jetson_cnn_forward.8} parent=0 // pred_check
    _
  $region15: #{simple_jetson_cnn_forward.8} parent=0 // pred_check_branch
    %391 = sbr.rel (0) target = $region17
  $region16: #{simple_jetson_cnn_forward.8} parent=0 // pred_region
    _
  $region17: #{simple_jetson_cnn_forward.8} parent=0 // pred_fallthru
    _
  // Predicated region
  $region18: #{simple_jetson_cnn_forward.8} parent=0 // pred_check
    _
  $region19: #{simple_jetson_cnn_forward.8} parent=0 // pred_check_branch
    %393 = sbr.rel (0) target = $region21
  $region20: #{simple_jetson_cnn_forward.8} parent=0 // pred_region
    _
  $region21: #{simple_jetson_cnn_forward.8} parent=0 // pred_fallthru
    _

// kernel: simple_jetson_cnn_forward.9
$region0: #{simple_jetson_cnn_forward.9}
  #allocation0 [shape = 'u32[]', space=smem, size = 0x4, offset = 0x4, fixed_abs, tag = 'smem constant byte address 0x4 - core index']
  #allocation1 [shape = 'u32[72,128]{1,0:T(1,128)}', space=vmem, size = 0x9000, scoped, tag = 'internal scratch']
  %s0 = inlined_call_operand.vmem [shape: bf16[2,1,128], index: 0, kind: input, shape index: {}]
  %s1 = inlined_call_operand.vmem [shape: f32[128,10], index: 1, kind: input, shape index: {}]
  %s2 = inlined_call_operand.vmem [shape: f32[1,10], index: 2, kind: input, shape index: {}]
  %s3 = inlined_call_operand.hbm [shape: f32[2,10], index: 3, kind: output, shape index: {}]
  %s4 = sld [smem:[#allocation0]]
  $region22: #{simple_jetson_cnn_forward.9} parent=0
    _
  %s6 = ssub.s32 1, %s4
  %s7 = scalar_select 0, %s6, %s4
  $region1: #{simple_jetson_cnn_forward.9} parent=0
    #allocation2 [shape = 'u8[1024]{0}', space=vmem, size = 0x400, scoped, tag = 'output window, operand 0, single buffered']
    #allocation3 [shape = 's32[1]{0}', space=sflag, size = 0x4, scoped, tag = 'scoped memory for simple_jetson_cnn_forward.9']
    %8 = vsyncpa [#allocation3], 0
    // Predicated region
    $region2: #{simple_jetson_cnn_forward.9} parent=1 // pred_check
      _
    $region3: #{simple_jetson_cnn_forward.9} parent=1 // pred_check_branch
      %10 = sbr.rel (0) target = $region5
    $region4: #{simple_jetson_cnn_forward.9} parent=1 // pred_region
      _
    $region5: #{simple_jetson_cnn_forward.9} parent=1 // pred_fallthru
      _
    // Predicated region
    $region6: #{simple_jetson_cnn_forward.9} parent=1 // pred_check
      _
    $region7: #{simple_jetson_cnn_forward.9} parent=1 // pred_check_branch
      %12 = sbr.rel (0) target = $region9
    $region8: #{simple_jetson_cnn_forward.9} parent=1 // pred_region
      _
    $region9: #{simple_jetson_cnn_forward.9} parent=1 // pred_fallthru
      _
    // Predicated region
    $region10: #{simple_jetson_cnn_forward.9} parent=1 // pred_check
      _
    $region11: #{simple_jetson_cnn_forward.9} parent=1 // pred_check_branch
      %14 = sbr.rel (0) target = $region13
    $region12: #{simple_jetson_cnn_forward.9} parent=1 // pred_region
      _
    $region13: #{simple_jetson_cnn_forward.9} parent=1 // pred_fallthru
      _
    %v15 = vld [vmem:[%s0] sm:$0x1]
    %v16 = vld [vmem:[%s0 + $0x1] sm:$0x1]
    %v17 = vunpack.c.l.bf16 %v15
    %v18 = vunpack.c.l.bf16 %v16
    %v19 = vadd.f32 %v17, 0.0
    %v20 = vadd.f32 %v18, 0.0
    %v21 = vld [vmem:[%s1] sm:$0xff]
    %v22 = vld [vmem:[%s1 + $0x8] sm:$0xff]
    %v23 = vld [vmem:[%s1 + $0x10] sm:$0xff]
    %v24 = vld [vmem:[%s1 + $0x18] sm:$0xff]
    %v25 = vld [vmem:[%s1 + $0x20] sm:$0xff]
    %v26 = vld [vmem:[%s1 + $0x28] sm:$0xff]
    %v27 = vld [vmem:[%s1 + $0x30] sm:$0xff]
    %v28 = vld [vmem:[%s1 + $0x38] sm:$0xff]
    %v29 = vld [vmem:[%s1 + $0x40] sm:$0xff]
    %v30 = vld [vmem:[%s1 + $0x48] sm:$0xff]
    %v31 = vld [vmem:[%s1 + $0x50] sm:$0xff]
    %v32 = vld [vmem:[%s1 + $0x58] sm:$0xff]
    %v33 = vld [vmem:[%s1 + $0x60] sm:$0xff]
    %v34 = vld [vmem:[%s1 + $0x68] sm:$0xff]
    %v35 = vld [vmem:[%s1 + $0x70] sm:$0xff]
    %v36 = vld [vmem:[%s1 + $0x78] sm:$0xff]
    %v37 = vld [vmem:[%s2] sm:$0x1]
    %v39 = vperm.slane %v37, 0
    %v43 = vperm.slane %v19, 0
    %v44 = vperm.slane %v20, 0
    %vm45 = vcmask 1041409
    %v46 = vsel %vm45, %v44, %v43
    %48 = vmatpush.msra.mxu0 %v36
    %49 = vmatpush.msra.mxu0 %v35
    %50 = vmatpush.msra.mxu0 %v34
    %51 = vmatpush.msra.mxu0 %v33
    %52 = vmatpush.msra.mxu0 %v32
    %53 = vmatpush.msra.mxu0 %v31
    %54 = vmatpush.msra.mxu0 %v30
    %55 = vmatpush.msra.mxu0 %v29
    %56 = vmatpush.msra.mxu0 %v28
    %57 = vmatpush.msra.mxu0 %v27
    %58 = vmatpush.msra.mxu0 %v26
    %59 = vmatpush.msra.mxu0 %v25
    %60 = vmatpush.msra.mxu0 %v24
    %61 = vmatpush.msra.mxu0 %v23
    %62 = vmatpush.msra.mxu0 %v22
    %63 = vmatpush.msra.mxu0 %v21
    %64 = vmatmul.f32.gmra.mxu0 %v46
    %v65 = vpop.f32.mrf.mxu0
    %v66 = vadd.f32 %v39, %v65
    %67 = vdwg.mxu0
    %vm68 = vcmask 74752
    %69 = vst.msk [vmem:[#allocation2] sm:$0x3] %vm68, %v66
    // Predicated region
    $region14: #{simple_jetson_cnn_forward.9} parent=1 // pred_check
      _
    $region15: #{simple_jetson_cnn_forward.9} parent=1 // pred_check_branch
      %71 = sbr.rel (0) target = $region17
    $region16: #{simple_jetson_cnn_forward.9} parent=1 // pred_region
      %73 = vsyncadd [#allocation3], 0
      %s75 = sshll.u32 [#allocation2], 4
      %s76 = int_to_ptr.vmem [resolvable:$true] %s75
      %s77 = sshll.u32 %s3, 4
      %s78 = int_to_ptr.hbm [resolvable:$true] %s77
      %80 = dma.vmem_to_hbm [thread:$0]  %s76, 32, %s78, [#allocation3]
    $region17: #{simple_jetson_cnn_forward.9} parent=1 // pred_fallthru
      _
    // Predicated region
    $region18: #{simple_jetson_cnn_forward.9} parent=1 // pred_check
      _
    $region19: #{simple_jetson_cnn_forward.9} parent=1 // pred_check_branch
      %82 = sbr.rel (0) target = $region21
    $region20: #{simple_jetson_cnn_forward.9} parent=1 // pred_region
      %84 = dma.done [#allocation3], 32
    $region21: #{simple_jetson_cnn_forward.9} parent=1 // pred_fallthru
      _
    %85 = vsyncpa [#allocation3], 1

</llo_original>
